<compile_context>
chip_gen: v5e
topology: v5e:2x2
jax: 0.10.0
libtpu: 0.0.40
codegen_flags: <defaults>
</compile_context>

<pallas_src>
import functools

import jax
import jax.numpy as jnp
from jax.experimental import pallas as pl
from jax.experimental.pallas import tpu as pltpu

# (dilation, padding) per Conv1d layer, kernel_size=2, stride 1 everywhere.
CFG = [(1, 1), (1, 0), (2, 1), (4, 2), (8, 4), (16, 8), (32, 16)]
N_LAYERS = len(CFG)


# ----------------------------- Pallas kernel --------------------------------
def _dilated_net_kernel(x_ref, w_ref, b_ref, o_ref, slab_ref, *, lens):
    # x_ref:    (TB, L)      f32 VMEM   raw input rows (lanes = sequence)
    # w_ref:    (2*N_LAYERS,) f32 SMEM  flattened conv taps [w0_0, w1_0, w0_1, ...]
    # b_ref:    (N_LAYERS,)  f32 SMEM   biases
    # o_ref:    (TB, L_out)  f32 VMEM   lane-exact output block
    # slab_ref: (TB, WP)     f32 VMEM   zero-padded working slab (scratch)
    l0 = x_ref.shape[1]
    wp = slab_ref.shape[1]
    l_final = lens[-1]

    # Build the working slab: lanes [0, L) = input, everything else exactly 0
    # (must be finite so that 0-weighted wrap-around reads stay 0).
    slab_ref[...] = jnp.zeros_like(slab_ref)
    slab_ref[:, :l0] = x_ref[...]
    h = slab_ref[...]

    lane = jax.lax.broadcasted_iota(jnp.int32, (1, wp), 1)

    for i, (d, p) in enumerate(CFG):
        l_in = lens[i]
        l_out = lens[i + 1]
        w0 = w_ref[2 * i]
        w1 = w_ref[2 * i + 1]
        b = b_ref[i]

        # Fold the conv zero-padding into per-lane tap vectors (built once per
        # tile, negligible (1, WP) work):
        #   y[t] = w0 * x[t - p]     valid iff 0 <= t - p     < l_in
        #        + w1 * x[t - p + d] valid iff 0 <= t - p + d < l_in
        #        + b                 for t < l_out
        # Lanes where a tap reads conv padding -- or where a roll wraps around
        # the WP window -- get an exact 0 weight, so no per-layer select and no
        # wrap-guard slack lanes are needed.
        w0m = jnp.where((lane >= p) & (lane < l_in + p), w0, 0.0)           # (1, WP)
        w1m = jnp.where((lane >= p - d) & (lane < l_in + p - d), w1, 0.0)   # (1, WP)
        bm = jnp.where(lane < l_out, b, 0.0)                                # (1, WP)

        s0 = p % wp           # t0[:, j] = h[:, j - p]      (mod WP)
        s1 = (p - d) % wp     # t1[:, j] = h[:, j - p + d]  (mod WP)
        t0 = pltpu.roll(h, shift=s0, axis=1) if s0 else h
        t1 = pltpu.roll(h, shift=s1, axis=1) if s1 else h

        y = w0m * t0 + w1m * t1 + bm
        h = jnp.tanh(y) if i < N_LAYERS - 1 else y

    o_ref[...] = h[:, :l_final]


# ----------------------------- glue / wrapper -------------------------------
def dilated_net_forward(x, params):
    """x: (B, L) float32. params: list of (w (2,), b ()) per layer."""
    x = x.astype(jnp.float32)
    B, L = x.shape

    # Sequence lengths through the stack: L_out = L_in + 2*p - d  (k=2, stride 1).
    lens = [L]
    for d, p in CFG:
        lens.append(lens[-1] + 2 * p - d)
    l_final = lens[-1]
    max_len = max(lens)

    # Minimal lane width: no wrap-guard slack needed (masked taps handle wrap).
    WP = ((max_len + 127) // 128) * 128

    # Batch tile: target a ~1 MiB (TB, WP) working slab, multiple of 8, capped
    # at 1024 rows; keep >= 2 grid steps when the batch allows it (dual-TC v7x).
    b_pad8 = ((B + 7) // 8) * 8
    tb_cap = max(8, ((1 << 20) // (WP * 4)) // 8 * 8)
    TB = min(1024, tb_cap, b_pad8)
    if b_pad8 < 2 * TB and b_pad8 >= 16:
        TB = max(8, (b_pad8 // 2) // 8 * 8)
    BP = ((B + TB - 1) // TB) * TB
    grid = (BP // TB,)

    # Only batch padding (cheap, (BP-B)*L), no lane padding in HBM.
    x_p = x if BP == B else jnp.pad(x, ((0, BP - B), (0, 0)))

    w_all = jnp.stack([params[i][0] for i in range(N_LAYERS)]
                      ).reshape(-1).astype(jnp.float32)                # (14,)
    b_all = jnp.stack([params[i][1] for i in range(N_LAYERS)]
                      ).astype(jnp.float32)                            # (7,)

    kernel = functools.partial(_dilated_net_kernel, lens=tuple(lens))

    out = pl.pallas_call(
        kernel,
        out_shape=jax.ShapeDtypeStruct((BP, l_final), jnp.float32),
        grid=grid,
        in_specs=[
            pl.BlockSpec((TB, L), lambda i: (i, 0)),                   # activations
            pl.BlockSpec(memory_space=pltpu.MemorySpace.SMEM),         # taps (14,)
            pl.BlockSpec(memory_space=pltpu.MemorySpace.SMEM),         # biases (7,)
        ],
        out_specs=pl.BlockSpec((TB, l_final), lambda i: (i, 0)),
        scratch_shapes=[pltpu.VMEM((TB, WP), jnp.float32)],
        compiler_params=pltpu.CompilerParams(
            dimension_semantics=("parallel",)),
        cost_estimate=pl.CostEstimate(
            flops=4 * N_LAYERS * BP * WP,
            transcendentals=(N_LAYERS - 1) * BP * WP,
            bytes_accessed=4 * (BP * L + BP * l_final)),
    )(x_p, w_all, b_all)

    return out if BP == B else out[:B]


# --------------------------- pure-JAX reference -----------------------------
def ref_forward(x, params):
    h = x.astype(jnp.float32)
    for i, ((w, b), (d, p)) in enumerate(zip(params, CFG)):
        l_in = h.shape[1]
        l_out = l_in + 2 * p - d
        hp = jnp.pad(h, ((0, 0), (p, p)))
        h = w[0] * hp[:, :l_out] + w[1] * hp[:, d:d + l_out] + b
        if i < N_LAYERS - 1:
            h = jnp.tanh(h)
    return h


# --------------------------------- main --------------------------------------
if __name__ == "__main__":
    key = jax.random.PRNGKey(0)
    kx, kp = jax.random.split(key)

    # PyTorch-default-like uniform(-1/sqrt(2), 1/sqrt(2)) init.
    bound = 1.0 / (2.0 ** 0.5)
    params = []
    pkey = kp
    for _ in range(N_LAYERS):
        pkey, kw, kb = jax.random.split(pkey, 3)
        w = jax.random.uniform(kw, (2,), minval=-bound, maxval=bound, dtype=jnp.float32)
        b = jax.random.uniform(kb, (), minval=-bound, maxval=bound, dtype=jnp.float32)
        params.append((w, b))

    # Small example: batch=5 (exercises batch pad/slice), sequence length=64
    # (long enough that even the dilation-32 layer sees real data).
    x = jax.random.normal(kx, (5, 64), dtype=jnp.float32)

    out = jax.block_until_ready(dilated_net_forward(x, params))

    ref = ref_forward(x, params)
    assert out.shape == ref.shape, (out.shape, ref.shape)
    assert jnp.allclose(out, ref, atol=1e-4, rtol=1e-4), (
        "mismatch", float(jnp.max(jnp.abs(out - ref))))

    print("KERNEL_OK")
</pallas_src>

<mosaic_0001>
module attributes {stable_mosaic.version = 11 : i64} {
  func.func @_dilated_net_kernel(%arg0: i32, %arg1: memref<8x64xf32, #tpu.memory_space<vmem>>, %arg2: memref<14xf32, #tpu.memory_space<smem>>, %arg3: memref<7xf32, #tpu.memory_space<smem>>, %arg4: memref<8x64xf32, #tpu.memory_space<vmem>>, %arg5: memref<8x128xf32, #tpu.memory_space<vmem>>) attributes {dimension_semantics = [#tpu.dimension_semantics<parallel>], iteration_bounds = array<i64: 1>, scalar_prefetch = 0 : i64, scratch_operands = 1 : i64, tpu.core_type = #tpu.core_type<tc>, window_params = [{transform_indices = @transform_0, window_bounds = array<i64: 8, 64>}, {transform_indices = @transform_1, window_bounds = array<i64: 14>}, {transform_indices = @transform_2, window_bounds = array<i64: 7>}, {transform_indices = @transform_3, window_bounds = array<i64: 8, 64>}]} {
    %cst = arith.constant 0.000000e+00 : f32
    %0 = vector.broadcast %cst : f32 to vector<8x128xf32>
    %c0 = arith.constant 0 : index
    %c0_0 = arith.constant 0 : index
    %1 = vector.load %arg5[%c0, %c0_0] : memref<8x128xf32, #tpu.memory_space<vmem>>, vector<8x128xf32>
    tpu.vector_store %arg5[%c0, %c0_0], %0 {strides = array<i32>} : memref<8x128xf32, #tpu.memory_space<vmem>>, vector<8x128xf32>,
    %c0_1 = arith.constant 0 : index
    %c0_2 = arith.constant 0 : index
    %2 = vector.load %arg1[%c0_1, %c0_2] : memref<8x64xf32, #tpu.memory_space<vmem>>, vector<8x64xf32>
    %c0_3 = arith.constant 0 : index
    %c0_4 = arith.constant 0 : index
    %3 = vector.load %arg5[%c0_3, %c0_4] : memref<8x128xf32, #tpu.memory_space<vmem>>, vector<8x64xf32>
    tpu.vector_store %arg5[%c0_3, %c0_4], %2 {strides = array<i32>} : memref<8x128xf32, #tpu.memory_space<vmem>>, vector<8x64xf32>,
    %c0_5 = arith.constant 0 : index
    %c0_6 = arith.constant 0 : index
    %4 = vector.load %arg5[%c0_5, %c0_6] : memref<8x128xf32, #tpu.memory_space<vmem>>, vector<8x128xf32>
    %5 = tpu.iota {dimensions = array<i32: 1>} : vector<1x128xi32>
    %c0_7 = arith.constant 0 : index
    %6 = memref.load %arg2[%c0_7] : memref<14xf32, #tpu.memory_space<smem>>
    %c1 = arith.constant 1 : index
    %7 = memref.load %arg2[%c1] : memref<14xf32, #tpu.memory_space<smem>>
    %c0_8 = arith.constant 0 : index
    %8 = memref.load %arg3[%c0_8] : memref<7xf32, #tpu.memory_space<smem>>
    %c1_i32 = arith.constant 1 : i32
    %9 = vector.broadcast %c1_i32 : i32 to vector<1x128xi32>
    %10 = arith.cmpi sge, %5, %9 : vector<1x128xi32>
    %c65_i32 = arith.constant 65 : i32
    %11 = vector.broadcast %c65_i32 : i32 to vector<1x128xi32>
    %12 = arith.cmpi slt, %5, %11 : vector<1x128xi32>
    %13 = arith.andi %10, %12 : vector<1x128xi1>
    %cst_9 = arith.constant 0.000000e+00 : f32
    %14 = vector.broadcast %6 : f32 to vector<1x128xf32>
    %15 = vector.broadcast %cst_9 : f32 to vector<1x128xf32>
    %16 = arith.select %13, %14, %15 : vector<1x128xi1>, vector<1x128xf32>
    %c0_i32 = arith.constant 0 : i32
    %17 = vector.broadcast %c0_i32 : i32 to vector<1x128xi32>
    %18 = arith.cmpi sge, %5, %17 : vector<1x128xi32>
    %c64_i32 = arith.constant 64 : i32
    %19 = vector.broadcast %c64_i32 : i32 to vector<1x128xi32>
    %20 = arith.cmpi slt, %5, %19 : vector<1x128xi32>
    %21 = arith.andi %18, %20 : vector<1x128xi1>
    %cst_10 = arith.constant 0.000000e+00 : f32
    %22 = vector.broadcast %7 : f32 to vector<1x128xf32>
    %23 = vector.broadcast %cst_10 : f32 to vector<1x128xf32>
    %24 = arith.select %21, %22, %23 : vector<1x128xi1>, vector<1x128xf32>
    %c65_i32_11 = arith.constant 65 : i32
    %25 = vector.broadcast %c65_i32_11 : i32 to vector<1x128xi32>
    %26 = arith.cmpi slt, %5, %25 : vector<1x128xi32>
    %cst_12 = arith.constant 0.000000e+00 : f32
    %27 = vector.broadcast %8 : f32 to vector<1x128xf32>
    %28 = vector.broadcast %cst_12 : f32 to vector<1x128xf32>
    %29 = arith.select %26, %27, %28 : vector<1x128xi1>, vector<1x128xf32>
    %c1_i32_13 = arith.constant 1 : i32
    %30 = tpu.dynamic_rotate %4 by %c1_i32_13 dim 1 : vector<8x128xf32>, i32 -> vector<8x128xf32>
    %31 = vector.broadcast %16 : vector<1x128xf32> to vector<8x128xf32>
    %32 = arith.mulf %31, %30 : vector<8x128xf32>
    %33 = vector.broadcast %24 : vector<1x128xf32> to vector<8x128xf32>
    %34 = arith.mulf %33, %4 : vector<8x128xf32>
    %35 = arith.addf %32, %34 : vector<8x128xf32>
    %36 = vector.broadcast %29 : vector<1x128xf32> to vector<8x128xf32>
    %37 = arith.addf %35, %36 : vector<8x128xf32>
    %38 = math.tanh %37 : vector<8x128xf32>
    %c2 = arith.constant 2 : index
    %39 = memref.load %arg2[%c2] : memref<14xf32, #tpu.memory_space<smem>>
    %c3 = arith.constant 3 : index
    %40 = memref.load %arg2[%c3] : memref<14xf32, #tpu.memory_space<smem>>
    %c1_14 = arith.constant 1 : index
    %41 = memref.load %arg3[%c1_14] : memref<7xf32, #tpu.memory_space<smem>>
    %c0_i32_15 = arith.constant 0 : i32
    %42 = vector.broadcast %c0_i32_15 : i32 to vector<1x128xi32>
    %43 = arith.cmpi sge, %5, %42 : vector<1x128xi32>
    %c65_i32_16 = arith.constant 65 : i32
    %44 = vector.broadcast %c65_i32_16 : i32 to vector<1x128xi32>
    %45 = arith.cmpi slt, %5, %44 : vector<1x128xi32>
    %46 = arith.andi %43, %45 : vector<1x128xi1>
    %cst_17 = arith.constant 0.000000e+00 : f32
    %47 = vector.broadcast %39 : f32 to vector<1x128xf32>
    %48 = vector.broadcast %cst_17 : f32 to vector<1x128xf32>
    %49 = arith.select %46, %47, %48 : vector<1x128xi1>, vector<1x128xf32>
    %c-1_i32 = arith.constant -1 : i32
    %50 = vector.broadcast %c-1_i32 : i32 to vector<1x128xi32>
    %51 = arith.cmpi sge, %5, %50 : vector<1x128xi32>
    %c64_i32_18 = arith.constant 64 : i32
    %52 = vector.broadcast %c64_i32_18 : i32 to vector<1x128xi32>
    %53 = arith.cmpi slt, %5, %52 : vector<1x128xi32>
    %54 = arith.andi %51, %53 : vector<1x128xi1>
    %cst_19 = arith.constant 0.000000e+00 : f32
    %55 = vector.broadcast %40 : f32 to vector<1x128xf32>
    %56 = vector.broadcast %cst_19 : f32 to vector<1x128xf32>
    %57 = arith.select %54, %55, %56 : vector<1x128xi1>, vector<1x128xf32>
    %c64_i32_20 = arith.constant 64 : i32
    %58 = vector.broadcast %c64_i32_20 : i32 to vector<1x128xi32>
    %59 = arith.cmpi slt, %5, %58 : vector<1x128xi32>
    %cst_21 = arith.constant 0.000000e+00 : f32
    %60 = vector.broadcast %41 : f32 to vector<1x128xf32>
    %61 = vector.broadcast %cst_21 : f32 to vector<1x128xf32>
    %62 = arith.select %59, %60, %61 : vector<1x128xi1>, vector<1x128xf32>
    %c127_i32 = arith.constant 127 : i32
    %63 = tpu.dynamic_rotate %38 by %c127_i32 dim 1 : vector<8x128xf32>, i32 -> vector<8x128xf32>
    %64 = vector.broadcast %49 : vector<1x128xf32> to vector<8x128xf32>
    %65 = arith.mulf %64, %38 : vector<8x128xf32>
    %66 = vector.broadcast %57 : vector<1x128xf32> to vector<8x128xf32>
    %67 = arith.mulf %66, %63 : vector<8x128xf32>
    %68 = arith.addf %65, %67 : vector<8x128xf32>
    %69 = vector.broadcast %62 : vector<1x128xf32> to vector<8x128xf32>
    %70 = arith.addf %68, %69 : vector<8x128xf32>
    %71 = math.tanh %70 : vector<8x128xf32>
    %c4 = arith.constant 4 : index
    %72 = memref.load %arg2[%c4] : memref<14xf32, #tpu.memory_space<smem>>
    %c5 = arith.constant 5 : index
    %73 = memref.load %arg2[%c5] : memref<14xf32, #tpu.memory_space<smem>>
    %c2_22 = arith.constant 2 : index
    %74 = memref.load %arg3[%c2_22] : memref<7xf32, #tpu.memory_space<smem>>
    %c1_i32_23 = arith.constant 1 : i32
    %75 = vector.broadcast %c1_i32_23 : i32 to vector<1x128xi32>
    %76 = arith.cmpi sge, %5, %75 : vector<1x128xi32>
    %c65_i32_24 = arith.constant 65 : i32
    %77 = vector.broadcast %c65_i32_24 : i32 to vector<1x128xi32>
    %78 = arith.cmpi slt, %5, %77 : vector<1x128xi32>
    %79 = arith.andi %76, %78 : vector<1x128xi1>
    %cst_25 = arith.constant 0.000000e+00 : f32
    %80 = vector.broadcast %72 : f32 to vector<1x128xf32>
    %81 = vector.broadcast %cst_25 : f32 to vector<1x128xf32>
    %82 = arith.select %79, %80, %81 : vector<1x128xi1>, vector<1x128xf32>
    %c-1_i32_26 = arith.constant -1 : i32
    %83 = vector.broadcast %c-1_i32_26 : i32 to vector<1x128xi32>
    %84 = arith.cmpi sge, %5, %83 : vector<1x128xi32>
    %c63_i32 = arith.constant 63 : i32
    %85 = vector.broadcast %c63_i32 : i32 to vector<1x128xi32>
    %86 = arith.cmpi slt, %5, %85 : vector<1x128xi32>
    %87 = arith.andi %84, %86 : vector<1x128xi1>
    %cst_27 = arith.constant 0.000000e+00 : f32
    %88 = vector.broadcast %73 : f32 to vector<1x128xf32>
    %89 = vector.broadcast %cst_27 : f32 to vector<1x128xf32>
    %90 = arith.select %87, %88, %89 : vector<1x128xi1>, vector<1x128xf32>
    %c64_i32_28 = arith.constant 64 : i32
    %91 = vector.broadcast %c64_i32_28 : i32 to vector<1x128xi32>
    %92 = arith.cmpi slt, %5, %91 : vector<1x128xi32>
    %cst_29 = arith.constant 0.000000e+00 : f32
    %93 = vector.broadcast %74 : f32 to vector<1x128xf32>
    %94 = vector.broadcast %cst_29 : f32 to vector<1x128xf32>
    %95 = arith.select %92, %93, %94 : vector<1x128xi1>, vector<1x128xf32>
    %c1_i32_30 = arith.constant 1 : i32
    %96 = tpu.dynamic_rotate %71 by %c1_i32_30 dim 1 : vector<8x128xf32>, i32 -> vector<8x128xf32>
    %c127_i32_31 = arith.constant 127 : i32
    %97 = tpu.dynamic_rotate %71 by %c127_i32_31 dim 1 : vector<8x128xf32>, i32 -> vector<8x128xf32>
    %98 = vector.broadcast %82 : vector<1x128xf32> to vector<8x128xf32>
    %99 = arith.mulf %98, %96 : vector<8x128xf32>
    %100 = vector.broadcast %90 : vector<1x128xf32> to vector<8x128xf32>
    %101 = arith.mulf %100, %97 : vector<8x128xf32>
    %102 = arith.addf %99, %101 : vector<8x128xf32>
    %103 = vector.broadcast %95 : vector<1x128xf32> to vector<8x128xf32>
    %104 = arith.addf %102, %103 : vector<8x128xf32>
    %105 = math.tanh %104 : vector<8x128xf32>
    %c6 = arith.constant 6 : index
    %106 = memref.load %arg2[%c6] : memref<14xf32, #tpu.memory_space<smem>>
    %c7 = arith.constant 7 : index
    %107 = memref.load %arg2[%c7] : memref<14xf32, #tpu.memory_space<smem>>
    %c3_32 = arith.constant 3 : index
    %108 = memref.load %arg3[%c3_32] : memref<7xf32, #tpu.memory_space<smem>>
    %c2_i32 = arith.constant 2 : i32
    %109 = vector.broadcast %c2_i32 : i32 to vector<1x128xi32>
    %110 = arith.cmpi sge, %5, %109 : vector<1x128xi32>
    %c66_i32 = arith.constant 66 : i32
    %111 = vector.broadcast %c66_i32 : i32 to vector<1x128xi32>
    %112 = arith.cmpi slt, %5, %111 : vector<1x128xi32>
    %113 = arith.andi %110, %112 : vector<1x128xi1>
    %cst_33 = arith.constant 0.000000e+00 : f32
    %114 = vector.broadcast %106 : f32 to vector<1x128xf32>
    %115 = vector.broadcast %cst_33 : f32 to vector<1x128xf32>
    %116 = arith.select %113, %114, %115 : vector<1x128xi1>, vector<1x128xf32>
    %c-2_i32 = arith.constant -2 : i32
    %117 = vector.broadcast %c-2_i32 : i32 to vector<1x128xi32>
    %118 = arith.cmpi sge, %5, %117 : vector<1x128xi32>
    %c62_i32 = arith.constant 62 : i32
    %119 = vector.broadcast %c62_i32 : i32 to vector<1x128xi32>
    %120 = arith.cmpi slt, %5, %119 : vector<1x128xi32>
    %121 = arith.andi %118, %120 : vector<1x128xi1>
    %cst_34 = arith.constant 0.000000e+00 : f32
    %122 = vector.broadcast %107 : f32 to vector<1x128xf32>
    %123 = vector.broadcast %cst_34 : f32 to vector<1x128xf32>
    %124 = arith.select %121, %122, %123 : vector<1x128xi1>, vector<1x128xf32>
    %c64_i32_35 = arith.constant 64 : i32
    %125 = vector.broadcast %c64_i32_35 : i32 to vector<1x128xi32>
    %126 = arith.cmpi slt, %5, %125 : vector<1x128xi32>
    %cst_36 = arith.constant 0.000000e+00 : f32
    %127 = vector.broadcast %108 : f32 to vector<1x128xf32>
    %128 = vector.broadcast %cst_36 : f32 to vector<1x128xf32>
    %129 = arith.select %126, %127, %128 : vector<1x128xi1>, vector<1x128xf32>
    %c2_i32_37 = arith.constant 2 : i32
    %130 = tpu.dynamic_rotate %105 by %c2_i32_37 dim 1 : vector<8x128xf32>, i32 -> vector<8x128xf32>
    %c126_i32 = arith.constant 126 : i32
    %131 = tpu.dynamic_rotate %105 by %c126_i32 dim 1 : vector<8x128xf32>, i32 -> vector<8x128xf32>
    %132 = vector.broadcast %116 : vector<1x128xf32> to vector<8x128xf32>
    %133 = arith.mulf %132, %130 : vector<8x128xf32>
    %134 = vector.broadcast %124 : vector<1x128xf32> to vector<8x128xf32>
    %135 = arith.mulf %134, %131 : vector<8x128xf32>
    %136 = arith.addf %133, %135 : vector<8x128xf32>
    %137 = vector.broadcast %129 : vector<1x128xf32> to vector<8x128xf32>
    %138 = arith.addf %136, %137 : vector<8x128xf32>
    %139 = math.tanh %138 : vector<8x128xf32>
    %c8 = arith.constant 8 : index
    %140 = memref.load %arg2[%c8] : memref<14xf32, #tpu.memory_space<smem>>
    %c9 = arith.constant 9 : index
    %141 = memref.load %arg2[%c9] : memref<14xf32, #tpu.memory_space<smem>>
    %c4_38 = arith.constant 4 : index
    %142 = memref.load %arg3[%c4_38] : memref<7xf32, #tpu.memory_space<smem>>
    %c4_i32 = arith.constant 4 : i32
    %143 = vector.broadcast %c4_i32 : i32 to vector<1x128xi32>
    %144 = arith.cmpi sge, %5, %143 : vector<1x128xi32>
    %c68_i32 = arith.constant 68 : i32
    %145 = vector.broadcast %c68_i32 : i32 to vector<1x128xi32>
    %146 = arith.cmpi slt, %5, %145 : vector<1x128xi32>
    %147 = arith.andi %144, %146 : vector<1x128xi1>
    %cst_39 = arith.constant 0.000000e+00 : f32
    %148 = vector.broadcast %140 : f32 to vector<1x128xf32>
    %149 = vector.broadcast %cst_39 : f32 to vector<1x128xf32>
    %150 = arith.select %147, %148, %149 : vector<1x128xi1>, vector<1x128xf32>
    %c-4_i32 = arith.constant -4 : i32
    %151 = vector.broadcast %c-4_i32 : i32 to vector<1x128xi32>
    %152 = arith.cmpi sge, %5, %151 : vector<1x128xi32>
    %c60_i32 = arith.constant 60 : i32
    %153 = vector.broadcast %c60_i32 : i32 to vector<1x128xi32>
    %154 = arith.cmpi slt, %5, %153 : vector<1x128xi32>
    %155 = arith.andi %152, %154 : vector<1x128xi1>
    %cst_40 = arith.constant 0.000000e+00 : f32
    %156 = vector.broadcast %141 : f32 to vector<1x128xf32>
    %157 = vector.broadcast %cst_40 : f32 to vector<1x128xf32>
    %158 = arith.select %155, %156, %157 : vector<1x128xi1>, vector<1x128xf32>
    %c64_i32_41 = arith.constant 64 : i32
    %159 = vector.broadcast %c64_i32_41 : i32 to vector<1x128xi32>
    %160 = arith.cmpi slt, %5, %159 : vector<1x128xi32>
    %cst_42 = arith.constant 0.000000e+00 : f32
    %161 = vector.broadcast %142 : f32 to vector<1x128xf32>
    %162 = vector.broadcast %cst_42 : f32 to vector<1x128xf32>
    %163 = arith.select %160, %161, %162 : vector<1x128xi1>, vector<1x128xf32>
    %c4_i32_43 = arith.constant 4 : i32
    %164 = tpu.dynamic_rotate %139 by %c4_i32_43 dim 1 : vector<8x128xf32>, i32 -> vector<8x128xf32>
    %c124_i32 = arith.constant 124 : i32
    %165 = tpu.dynamic_rotate %139 by %c124_i32 dim 1 : vector<8x128xf32>, i32 -> vector<8x128xf32>
    %166 = vector.broadcast %150 : vector<1x128xf32> to vector<8x128xf32>
    %167 = arith.mulf %166, %164 : vector<8x128xf32>
    %168 = vector.broadcast %158 : vector<1x128xf32> to vector<8x128xf32>
    %169 = arith.mulf %168, %165 : vector<8x128xf32>
    %170 = arith.addf %167, %169 : vector<8x128xf32>
    %171 = vector.broadcast %163 : vector<1x128xf32> to vector<8x128xf32>
    %172 = arith.addf %170, %171 : vector<8x128xf32>
    %173 = math.tanh %172 : vector<8x128xf32>
    %c10 = arith.constant 10 : index
    %174 = memref.load %arg2[%c10] : memref<14xf32, #tpu.memory_space<smem>>
    %c11 = arith.constant 11 : index
    %175 = memref.load %arg2[%c11] : memref<14xf32, #tpu.memory_space<smem>>
    %c5_44 = arith.constant 5 : index
    %176 = memref.load %arg3[%c5_44] : memref<7xf32, #tpu.memory_space<smem>>
    %c8_i32 = arith.constant 8 : i32
    %177 = vector.broadcast %c8_i32 : i32 to vector<1x128xi32>
    %178 = arith.cmpi sge, %5, %177 : vector<1x128xi32>
    %c72_i32 = arith.constant 72 : i32
    %179 = vector.broadcast %c72_i32 : i32 to vector<1x128xi32>
    %180 = arith.cmpi slt, %5, %179 : vector<1x128xi32>
    %181 = arith.andi %178, %180 : vector<1x128xi1>
    %cst_45 = arith.constant 0.000000e+00 : f32
    %182 = vector.broadcast %174 : f32 to vector<1x128xf32>
    %183 = vector.broadcast %cst_45 : f32 to vector<1x128xf32>
    %184 = arith.select %181, %182, %183 : vector<1x128xi1>, vector<1x128xf32>
    %c-8_i32 = arith.constant -8 : i32
    %185 = vector.broadcast %c-8_i32 : i32 to vector<1x128xi32>
    %186 = arith.cmpi sge, %5, %185 : vector<1x128xi32>
    %c56_i32 = arith.constant 56 : i32
    %187 = vector.broadcast %c56_i32 : i32 to vector<1x128xi32>
    %188 = arith.cmpi slt, %5, %187 : vector<1x128xi32>
    %189 = arith.andi %186, %188 : vector<1x128xi1>
    %cst_46 = arith.constant 0.000000e+00 : f32
    %190 = vector.broadcast %175 : f32 to vector<1x128xf32>
    %191 = vector.broadcast %cst_46 : f32 to vector<1x128xf32>
    %192 = arith.select %189, %190, %191 : vector<1x128xi1>, vector<1x128xf32>
    %c64_i32_47 = arith.constant 64 : i32
    %193 = vector.broadcast %c64_i32_47 : i32 to vector<1x128xi32>
    %194 = arith.cmpi slt, %5, %193 : vector<1x128xi32>
    %cst_48 = arith.constant 0.000000e+00 : f32
    %195 = vector.broadcast %176 : f32 to vector<1x128xf32>
    %196 = vector.broadcast %cst_48 : f32 to vector<1x128xf32>
    %197 = arith.select %194, %195, %196 : vector<1x128xi1>, vector<1x128xf32>
    %c8_i32_49 = arith.constant 8 : i32
    %198 = tpu.dynamic_rotate %173 by %c8_i32_49 dim 1 : vector<8x128xf32>, i32 -> vector<8x128xf32>
    %c120_i32 = arith.constant 120 : i32
    %199 = tpu.dynamic_rotate %173 by %c120_i32 dim 1 : vector<8x128xf32>, i32 -> vector<8x128xf32>
    %200 = vector.broadcast %184 : vector<1x128xf32> to vector<8x128xf32>
    %201 = arith.mulf %200, %198 : vector<8x128xf32>
    %202 = vector.broadcast %192 : vector<1x128xf32> to vector<8x128xf32>
    %203 = arith.mulf %202, %199 : vector<8x128xf32>
    %204 = arith.addf %201, %203 : vector<8x128xf32>
    %205 = vector.broadcast %197 : vector<1x128xf32> to vector<8x128xf32>
    %206 = arith.addf %204, %205 : vector<8x128xf32>
    %207 = math.tanh %206 : vector<8x128xf32>
    %c12 = arith.constant 12 : index
    %208 = memref.load %arg2[%c12] : memref<14xf32, #tpu.memory_space<smem>>
    %c13 = arith.constant 13 : index
    %209 = memref.load %arg2[%c13] : memref<14xf32, #tpu.memory_space<smem>>
    %c6_50 = arith.constant 6 : index
    %210 = memref.load %arg3[%c6_50] : memref<7xf32, #tpu.memory_space<smem>>
    %c16_i32 = arith.constant 16 : i32
    %211 = vector.broadcast %c16_i32 : i32 to vector<1x128xi32>
    %212 = arith.cmpi sge, %5, %211 : vector<1x128xi32>
    %c80_i32 = arith.constant 80 : i32
    %213 = vector.broadcast %c80_i32 : i32 to vector<1x128xi32>
    %214 = arith.cmpi slt, %5, %213 : vector<1x128xi32>
    %215 = arith.andi %212, %214 : vector<1x128xi1>
    %cst_51 = arith.constant 0.000000e+00 : f32
    %216 = vector.broadcast %208 : f32 to vector<1x128xf32>
    %217 = vector.broadcast %cst_51 : f32 to vector<1x128xf32>
    %218 = arith.select %215, %216, %217 : vector<1x128xi1>, vector<1x128xf32>
    %c-16_i32 = arith.constant -16 : i32
    %219 = vector.broadcast %c-16_i32 : i32 to vector<1x128xi32>
    %220 = arith.cmpi sge, %5, %219 : vector<1x128xi32>
    %c48_i32 = arith.constant 48 : i32
    %221 = vector.broadcast %c48_i32 : i32 to vector<1x128xi32>
    %222 = arith.cmpi slt, %5, %221 : vector<1x128xi32>
    %223 = arith.andi %220, %222 : vector<1x128xi1>
    %cst_52 = arith.constant 0.000000e+00 : f32
    %224 = vector.broadcast %209 : f32 to vector<1x128xf32>
    %225 = vector.broadcast %cst_52 : f32 to vector<1x128xf32>
    %226 = arith.select %223, %224, %225 : vector<1x128xi1>, vector<1x128xf32>
    %c64_i32_53 = arith.constant 64 : i32
    %227 = vector.broadcast %c64_i32_53 : i32 to vector<1x128xi32>
    %228 = arith.cmpi slt, %5, %227 : vector<1x128xi32>
    %cst_54 = arith.constant 0.000000e+00 : f32
    %229 = vector.broadcast %210 : f32 to vector<1x128xf32>
    %230 = vector.broadcast %cst_54 : f32 to vector<1x128xf32>
    %231 = arith.select %228, %229, %230 : vector<1x128xi1>, vector<1x128xf32>
    %c16_i32_55 = arith.constant 16 : i32
    %232 = tpu.dynamic_rotate %207 by %c16_i32_55 dim 1 : vector<8x128xf32>, i32 -> vector<8x128xf32>
    %c112_i32 = arith.constant 112 : i32
    %233 = tpu.dynamic_rotate %207 by %c112_i32 dim 1 : vector<8x128xf32>, i32 -> vector<8x128xf32>
    %234 = vector.broadcast %218 : vector<1x128xf32> to vector<8x128xf32>
    %235 = arith.mulf %234, %232 : vector<8x128xf32>
    %236 = vector.broadcast %226 : vector<1x128xf32> to vector<8x128xf32>
    %237 = arith.mulf %236, %233 : vector<8x128xf32>
    %238 = arith.addf %235, %237 : vector<8x128xf32>
    %239 = vector.broadcast %231 : vector<1x128xf32> to vector<8x128xf32>
    %240 = arith.addf %238, %239 : vector<8x128xf32>
    %241 = vector.extract_strided_slice %240 {offsets = [0, 0], sizes = [8, 64], strides = [1, 1]} : vector<8x128xf32> to vector<8x64xf32>
    %c0_56 = arith.constant 0 : index
    %c0_57 = arith.constant 0 : index
    %242 = vector.load %arg4[%c0_56, %c0_57] : memref<8x64xf32, #tpu.memory_space<vmem>>, vector<8x64xf32>
    tpu.vector_store %arg4[%c0_56, %c0_57], %241 {strides = array<i32>} : memref<8x64xf32, #tpu.memory_space<vmem>>, vector<8x64xf32>,
    return
  }
  func.func @transform_0(%arg0: i32) -> (i32, i32) {
    %c0_i32 = arith.constant 0 : i32
    %c0_i32_0 = arith.constant 0 : i32
    return %arg0, %c0_i32 : i32, i32
  }
  func.func @transform_1(%arg0: i32) -> i32 {
    %c0_i32 = arith.constant 0 : i32
    %c0_i32_0 = arith.constant 0 : i32
    return %c0_i32 : i32
  }
  func.func @transform_2(%arg0: i32) -> i32 {
    %c0_i32 = arith.constant 0 : i32
    %c0_i32_0 = arith.constant 0 : i32
    return %c0_i32 : i32
  }
  func.func @transform_3(%arg0: i32) -> (i32, i32) {
    %c0_i32 = arith.constant 0 : i32
    %c0_i32_0 = arith.constant 0 : i32
    return %arg0, %c0_i32 : i32, i32
  }
}

</mosaic_0001>

<llo_original>
// kernel: tpu_custom_call.1
$region0: #{tpu_custom_call.1}
  #allocation0 [shape = 'u32[]', space=smem, size = 0x4, offset = 0x4, fixed_abs, tag = 'smem constant byte address 0x4 - core index']
  #allocation1 [shape = 'u32[72,128]{1,0:T(1,128)}', space=vmem, size = 0x9000, scoped, tag = 'internal scratch']
  #allocation2 [shape = 'f32[8,128]{1,0:T(8,128)}', space=vmem, size = 0x1000, scoped, tag = 'scratch operand']
  %s0 = inlined_call_operand.hbm [shape: f32[8,64], index: 0, kind: input, shape index: {}]
  %s1 = inlined_call_operand.hbm [shape: f32[14], index: 1, kind: input, shape index: {}]
  %s2 = inlined_call_operand.vmem [shape: f32[7], index: 2, kind: input, shape index: {}]
  %s3 = inlined_call_operand.hbm [shape: f32[8,64], index: 3, kind: output, shape index: {}]
  %s4 = sld [smem:[#allocation0]]
  $region34: #{tpu_custom_call.1} parent=0
    _
  %s6 = ssub.s32 1, %s4
  %s7 = scalar_select 0, %s6, %s4
  $region1: #{tpu_custom_call.1} parent=0
    #allocation3 [shape = 'u8[4096]{0}', space=vmem, size = 0x1000, scoped, tag = 'input window, operand 0, single buffered']
    #allocation4 [shape = 's32[1]{0}', space=sflag, size = 0x4, scoped, tag = 'scoped memory for tpu_custom_call.1']
    #allocation5 [shape = 's32[1]{0}', space=sflag, size = 0x4, scoped, tag = 'scoped memory for tpu_custom_call.1']
    #allocation6 [shape = 's32[1]{0}', space=sflag, size = 0x4, scoped, tag = 'scoped memory for tpu_custom_call.1']
    #allocation7 [shape = 's32[1]{0}', space=sflag, size = 0x4, scoped, tag = 'scoped memory for tpu_custom_call.1']
    #allocation8 [shape = 'u8[512]{0}', space=smem, size = 0x200, scoped, tag = 'input window, operand 1, single buffered']
    #allocation9 [shape = 'u8[512]{0}', space=smem, size = 0x200, scoped, tag = 'input window, operand 2, single buffered']
    #allocation10 [shape = 'u8[4096]{0}', space=vmem, size = 0x1000, scoped, tag = 'output window, operand 0, single buffered']
    %8 = vsyncpa [#allocation4], 0
    %9 = vsyncpa [#allocation6], 0
    %10 = vsyncpa [#allocation7], 0
    %11 = vsyncpa [#allocation5], 0
    // Predicated region
    $region2: #{tpu_custom_call.1} parent=1 // pred_check
      _
    $region3: #{tpu_custom_call.1} parent=1 // pred_check_branch
      %13 = sbr.rel (0) target = $region5
    $region4: #{tpu_custom_call.1} parent=1 // pred_region
      %15 = vsyncadd [#allocation4], 0
      %s17 = sshll.u32 %s0, 4
      %s18 = int_to_ptr.hbm [resolvable:$true] %s17
      %s19 = sshll.u32 [#allocation3], 4
      %s20 = int_to_ptr.vmem [resolvable:$true] %s19
      %22 = dma.hbm_to_vmem [thread:$0]  %s18, 128, %s20, [#allocation4]
    $region5: #{tpu_custom_call.1} parent=1 // pred_fallthru
      _
    // Predicated region
    $region6: #{tpu_custom_call.1} parent=1 // pred_check
      _
    $region7: #{tpu_custom_call.1} parent=1 // pred_check_branch
      %24 = sbr.rel (0) target = $region9
    $region8: #{tpu_custom_call.1} parent=1 // pred_region
      %26 = vsyncadd [#allocation6], 0
      %s28 = sshll.u32 %s1, 4
      %s29 = int_to_ptr.hbm [resolvable:$true] %s28
      %31 = dma.hbm_to_smem %s29, 16, [#allocation8], [#allocation6]
    $region9: #{tpu_custom_call.1} parent=1 // pred_fallthru
      _
    // Predicated region
    $region10: #{tpu_custom_call.1} parent=1 // pred_check
      _
    $region11: #{tpu_custom_call.1} parent=1 // pred_check_branch
      %33 = sbr.rel (0) target = $region13
    $region12: #{tpu_custom_call.1} parent=1 // pred_region
      %35 = vsyncadd [#allocation7], 0
      %s37 = sshll.u32 %s2, 4
      %s38 = int_to_ptr.vmem [resolvable:$true] %s37
      %40 = dma.vmem_to_smem %s38, 16, [#allocation9], [#allocation7]
    $region13: #{tpu_custom_call.1} parent=1 // pred_fallthru
      _
    // Predicated region
    $region14: #{tpu_custom_call.1} parent=1 // pred_check
      _
    $region15: #{tpu_custom_call.1} parent=1 // pred_check_branch
      %42 = sbr.rel (0) target = $region17
    $region16: #{tpu_custom_call.1} parent=1 // pred_region
      %44 = dma.done [#allocation4], 128
    $region17: #{tpu_custom_call.1} parent=1 // pred_fallthru
      _
    // Predicated region
    $region18: #{tpu_custom_call.1} parent=1 // pred_check
      _
    $region19: #{tpu_custom_call.1} parent=1 // pred_check_branch
      %46 = sbr.rel (0) target = $region21
    $region20: #{tpu_custom_call.1} parent=1 // pred_region
      %48 = dma.done [#allocation6], 16
    $region21: #{tpu_custom_call.1} parent=1 // pred_fallthru
      _
    // Predicated region
    $region22: #{tpu_custom_call.1} parent=1 // pred_check
      _
    $region23: #{tpu_custom_call.1} parent=1 // pred_check_branch
      %50 = sbr.rel (0) target = $region25
    $region24: #{tpu_custom_call.1} parent=1 // pred_region
      %52 = dma.done [#allocation7], 16
    $region25: #{tpu_custom_call.1} parent=1 // pred_fallthru
      _
    %53 = sfence
    %54 = vst [vmem:[#allocation2] sm:$0xff] 0.0
    %v55 = vld [vmem:[#allocation3] sm:$0xff]
    %vm56 = vcmask 523264
    %57 = vst.msk [vmem:[#allocation2] sm:$0xff] %vm56, %v55
    %v58 = vld [vmem:[#allocation2] sm:$0xff]
    %v59 = vlaneseq
    %v60 = vand.u32 %v59, 127
    %s61 = sld [smem:[#allocation8]]
    %s62 = sld [smem:[#allocation8 + $0x1]]
    %s63 = sld [smem:[#allocation9]]
    %vm64 = vcmp.ge.s32.totalorder %v60, 1
    %vm65 = vcmp.lt.s32.totalorder %v60, 65
    %vm66 = vmand %vm64, %vm65
    %v67 = vstv %s61
    %v68 = vsel %vm66, %v67, 0.0
    %vm69 = vcmp.ge.s32.totalorder %v60, 0
    %vm70 = vcmp.lt.s32.totalorder %v60, 64
    %vm71 = vmand %vm69, %vm70
    %v72 = vstv %s62
    %v73 = vsel %vm71, %v72, 0.0
    %v74 = vstv %s63
    %v75 = vsel %vm65, %v74, 0.0
    %76 = vrot.lane.b32.xlu0 %v58, 1
    %v77 = vpop.permute.xlu0 %76
    %v78 = vmul.f32 %v68, %v77
    %v79 = vmul.f32 %v73, %v58
    %v80 = vadd.f32 %v78, %v79
    %v81 = vadd.f32 %v80, %v75
    %v82 = vtanh.pop %v81
    %s83 = sld [smem:[#allocation8 + $0x2]]
    %s84 = sld [smem:[#allocation8 + $0x3]]
    %s85 = sld [smem:[#allocation9 + $0x1]]
    %vm86 = vmand %vm69, %vm65
    %v87 = vstv %s83
    %v88 = vsel %vm86, %v87, 0.0
    %vm89 = vcmp.ge.s32.totalorder %v60, 4294967295
    %vm90 = vmand %vm89, %vm70
    %v91 = vstv %s84
    %v92 = vsel %vm90, %v91, 0.0
    %v93 = vstv %s85
    %v94 = vsel %vm70, %v93, 0.0
    %95 = vrot.lane.b32.xlu0 %v82, 127
    %v96 = vpop.permute.xlu0 %95
    %v97 = vmul.f32 %v88, %v82
    %v98 = vmul.f32 %v92, %v96
    %v99 = vadd.f32 %v97, %v98
    %v100 = vadd.f32 %v99, %v94
    %v101 = vtanh.pop %v100
    %s102 = sld [smem:[#allocation8 + $0x4]]
    %s103 = sld [smem:[#allocation8 + $0x5]]
    %s104 = sld [smem:[#allocation9 + $0x2]]
    %v105 = vstv %s102
    %v106 = vsel %vm66, %v105, 0.0
    %vm107 = vcmp.lt.s32.totalorder %v60, 63
    %vm108 = vmand %vm89, %vm107
    %v109 = vstv %s103
    %v110 = vsel %vm108, %v109, 0.0
    %v111 = vstv %s104
    %v112 = vsel %vm70, %v111, 0.0
    %113 = vrot.lane.b32.xlu0 %v101, 1
    %v114 = vpop.permute.xlu0 %113
    %115 = vrot.lane.b32.xlu0 %v101, 127
    %v116 = vpop.permute.xlu0 %115
    %v117 = vmul.f32 %v106, %v114
    %v118 = vmul.f32 %v110, %v116
    %v119 = vadd.f32 %v117, %v118
    %v120 = vadd.f32 %v119, %v112
    %v121 = vtanh.pop %v120
    %s122 = sld [smem:[#allocation8 + $0x6]]
    %s123 = sld [smem:[#allocation8 + $0x7]]
    %s124 = sld [smem:[#allocation9 + $0x3]]
    %vm125 = vcmp.ge.s32.totalorder %v60, 2
    %vm126 = vcmp.lt.s32.totalorder %v60, 66
    %vm127 = vmand %vm125, %vm126
    %v128 = vstv %s122
    %v129 = vsel %vm127, %v128, 0.0
    %vm130 = vcmp.ge.s32.totalorder %v60, 4294967294
    %vm131 = vcmp.lt.s32.totalorder %v60, 62
    %vm132 = vmand %vm130, %vm131
    %v133 = vstv %s123
    %v134 = vsel %vm132, %v133, 0.0
    %v135 = vstv %s124
    %v136 = vsel %vm70, %v135, 0.0
    %137 = vrot.lane.b32.xlu0 %v121, 2
    %v138 = vpop.permute.xlu0 %137
    %139 = vrot.lane.b32.xlu0 %v121, 126
    %v140 = vpop.permute.xlu0 %139
    %v141 = vmul.f32 %v129, %v138
    %v142 = vmul.f32 %v134, %v140
    %v143 = vadd.f32 %v141, %v142
    %v144 = vadd.f32 %v143, %v136
    %v145 = vtanh.pop %v144
    %s146 = sld [smem:[#allocation8 + $0x8]]
    %s147 = sld [smem:[#allocation8 + $0x9]]
    %s148 = sld [smem:[#allocation9 + $0x4]]
    %vm149 = vcmp.ge.s32.totalorder %v60, 4
    %vm150 = vcmp.lt.s32.totalorder %v60, 68
    %vm151 = vmand %vm149, %vm150
    %v152 = vstv %s146
    %v153 = vsel %vm151, %v152, 0.0
    %vm154 = vcmp.ge.s32.totalorder %v60, 4294967292
    %vm155 = vcmp.lt.s32.totalorder %v60, 60
    %vm156 = vmand %vm154, %vm155
    %v157 = vstv %s147
    %v158 = vsel %vm156, %v157, 0.0
    %v159 = vstv %s148
    %v160 = vsel %vm70, %v159, 0.0
    %161 = vrot.lane.b32.xlu0 %v145, 4
    %v162 = vpop.permute.xlu0 %161
    %163 = vrot.lane.b32.xlu0 %v145, 124
    %v164 = vpop.permute.xlu0 %163
    %v165 = vmul.f32 %v153, %v162
    %v166 = vmul.f32 %v158, %v164
    %v167 = vadd.f32 %v165, %v166
    %v168 = vadd.f32 %v167, %v160
    %v169 = vtanh.pop %v168
    %s170 = sld [smem:[#allocation8 + $0xa]]
    %s171 = sld [smem:[#allocation8 + $0xb]]
    %s172 = sld [smem:[#allocation9 + $0x5]]
    %vm173 = vcmp.ge.s32.totalorder %v60, 8
    %vm174 = vcmp.lt.s32.totalorder %v60, 72
    %vm175 = vmand %vm173, %vm174
    %v176 = vstv %s170
    %v177 = vsel %vm175, %v176, 0.0
    %vm178 = vcmp.ge.s32.totalorder %v60, 4294967288
    %vm179 = vcmp.lt.s32.totalorder %v60, 56
    %vm180 = vmand %vm178, %vm179
    %v181 = vstv %s171
    %v182 = vsel %vm180, %v181, 0.0
    %v183 = vstv %s172
    %v184 = vsel %vm70, %v183, 0.0
    %185 = vrot.lane.b32.xlu0 %v169, 8
    %v186 = vpop.permute.xlu0 %185
    %187 = vrot.lane.b32.xlu0 %v169, 120
    %v188 = vpop.permute.xlu0 %187
    %v189 = vmul.f32 %v177, %v186
    %v190 = vmul.f32 %v182, %v188
    %v191 = vadd.f32 %v189, %v190
    %v192 = vadd.f32 %v191, %v184
    %v193 = vtanh.pop %v192
    %s194 = sld [smem:[#allocation8 + $0xc]]
    %s195 = sld [smem:[#allocation8 + $0xd]]
    %s196 = sld [smem:[#allocation9 + $0x6]]
    %vm197 = vcmp.ge.s32.totalorder %v60, 16
    %vm198 = vcmp.lt.s32.totalorder %v60, 80
    %vm199 = vmand %vm197, %vm198
    %v200 = vstv %s194
    %v201 = vsel %vm199, %v200, 0.0
    %vm202 = vcmp.ge.s32.totalorder %v60, 4294967280
    %vm203 = vcmp.lt.s32.totalorder %v60, 48
    %vm204 = vmand %vm202, %vm203
    %v205 = vstv %s195
    %v206 = vsel %vm204, %v205, 0.0
    %v207 = vstv %s196
    %v208 = vsel %vm70, %v207, 0.0
    %209 = vrot.lane.b32.xlu0 %v193, 16
    %v210 = vpop.permute.xlu0 %209
    %211 = vrot.lane.b32.xlu0 %v193, 112
    %v212 = vpop.permute.xlu0 %211
    %v213 = vmul.f32 %v201, %v210
    %v214 = vmul.f32 %v206, %v212
    %v215 = vadd.f32 %v213, %v214
    %v216 = vadd.f32 %v215, %v208
    %217 = vst.msk [vmem:[#allocation10] sm:$0xff] %vm56, %v216
    // Predicated region
    $region26: #{tpu_custom_call.1} parent=1 // pred_check
      _
    $region27: #{tpu_custom_call.1} parent=1 // pred_check_branch
      %219 = sbr.rel (0) target = $region29
    $region28: #{tpu_custom_call.1} parent=1 // pred_region
      %221 = vsyncadd [#allocation5], 0
      %s223 = sshll.u32 [#allocation10], 4
      %s224 = int_to_ptr.vmem [resolvable:$true] %s223
      %s225 = sshll.u32 %s3, 4
      %s226 = int_to_ptr.hbm [resolvable:$true] %s225
      %228 = dma.vmem_to_hbm [thread:$0]  %s224, 128, %s226, [#allocation5]
    $region29: #{tpu_custom_call.1} parent=1 // pred_fallthru
      _
    // Predicated region
    $region30: #{tpu_custom_call.1} parent=1 // pred_check
      _
    $region31: #{tpu_custom_call.1} parent=1 // pred_check_branch
      %230 = sbr.rel (0) target = $region33
    $region32: #{tpu_custom_call.1} parent=1 // pred_region
      %232 = dma.done [#allocation5], 128
    $region33: #{tpu_custom_call.1} parent=1 // pred_fallthru
      _
    %233 = vsyncpa [#allocation4], 1
    %234 = vsyncpa [#allocation5], 1
    %235 = vsyncpa [#allocation6], 1
    %236 = vsyncpa [#allocation7], 1

</llo_original>
